<compile_context>
chip_gen: v7x
topology: tpu7x:2x2x1
jax: 0.10.0
libtpu: 0.0.40
codegen_flags: <defaults>
</compile_context>

<pallas_src>
import jax
import jax.numpy as jnp
from jax.experimental import pallas as pl
from jax.experimental.pallas import tpu as pltpu


def _round_up(n, m):
    return ((n + m - 1) // m) * m


def _cdiv(a, b):
    return -(-a // b)


def _vmem_capacity_bytes():
    """Per-core VMEM capacity, with a conservative fallback."""
    try:
        info = pltpu.get_tpu_info()
        cap = getattr(info, "vmem_capacity_bytes", None)
        if cap:
            return int(cap)
    except Exception:
        pass
    return 64 << 20  # conservative (v7x per-TC)


# ----------------------------------------------------------------------------
# Kernels
# ----------------------------------------------------------------------------
def _mlp_resident_kernel(x_ref, w1_ref, b1_ref, w2_ref, b2_ref, o_ref):
    """All weights VMEM-resident; one batch tile per grid step."""
    xb = x_ref[...].astype(jnp.bfloat16)                      # cast in-kernel (free VPU op)
    h = jnp.dot(xb, w1_ref[...], preferred_element_type=jnp.float32)
    h = jnp.maximum(h + b1_ref[...], 0.0)                     # BN folded; eval Dropout = identity
    y = jnp.dot(h.astype(jnp.bfloat16), w2_ref[...],
                preferred_element_type=jnp.float32)
    y = y + b2_ref[...]
    # Sigmoid via exp + approx reciprocal: both ride the otherwise-idle EUP slot.
    o_ref[...] = pl.reciprocal(1.0 + jnp.exp(-y), approx=True).astype(o_ref.dtype)


def _mlp_streamed_kernel(x_ref, w1_ref, b1_ref, w2_ref, b2_ref, o_ref, acc_ref):
    """Weights streamed in hid-tiles; fp32 accumulator over the hid axis."""
    j = pl.program_id(1)

    @pl.when(j == 0)
    def _():
        acc_ref[...] = jnp.zeros_like(acc_ref)

    xb = x_ref[...].astype(jnp.bfloat16)
    h = jnp.dot(xb, w1_ref[...], preferred_element_type=jnp.float32)
    h = jnp.maximum(h + b1_ref[...], 0.0)
    acc_ref[...] += jnp.dot(h.astype(jnp.bfloat16), w2_ref[...],
                            preferred_element_type=jnp.float32)

    @pl.when(j == pl.num_programs(1) - 1)
    def _():
        y = acc_ref[...] + b2_ref[...]
        o_ref[...] = pl.reciprocal(1.0 + jnp.exp(-y), approx=True).astype(o_ref.dtype)


# ----------------------------------------------------------------------------
# One-time parameter preparation (hoisted off the per-call path)
# ----------------------------------------------------------------------------
def prepare_net_params(params, *, eps=1e-5):
    """Fold eval-mode BatchNorm1d + Linear1 bias into Linear1, cast weights to
    bf16, and zero-pad hid/out_dim to lane multiples. Call ONCE per parameter
    set and reuse the result across net_forward() calls."""
    in_dim, hid = params["w1"].shape
    out_dim = params["w2"].shape[1]

    inv_std = 1.0 / jnp.sqrt(params["run_var"] + eps)
    scale = params["gamma"] * inv_std                              # (hid,)
    w1f = params["w1"] * scale[None, :]                            # (in_dim, hid)
    b1f = (params["b1"] - params["run_mean"]) * scale + params["beta"]

    hid_pad = _round_up(hid, 128)      # MXU N of matmul1 / K of matmul2
    out_pad = _round_up(out_dim, 128)  # lane-dense output store

    w1f = jnp.pad(w1f, ((0, 0), (0, hid_pad - hid))).astype(jnp.bfloat16)
    b1f = jnp.pad(b1f, (0, hid_pad - hid)).reshape(1, hid_pad).astype(jnp.float32)
    w2p = jnp.pad(params["w2"], ((0, hid_pad - hid), (0, out_pad - out_dim))
                  ).astype(jnp.bfloat16)
    b2p = jnp.pad(params["b2"], (0, out_pad - out_dim)).reshape(1, out_pad
                  ).astype(jnp.float32)

    return {"w1f": w1f, "b1f": b1f, "w2p": w2p, "b2p": b2p,
            "in_dim": in_dim, "hid": hid, "hid_pad": hid_pad,
            "out_dim": out_dim, "out_pad": out_pad}


# ----------------------------------------------------------------------------
# Forward
# ----------------------------------------------------------------------------
def net_forward(x, prep, *, force_streamed=False, tile_h=None):
    """Eval-mode forward of Net. x: (B, in_dim) float32; prep: prepare_net_params()."""
    B, in_dim = x.shape
    assert in_dim == prep["in_dim"]
    hid_pad, out_pad, out_dim = prep["hid_pad"], prep["out_pad"], prep["out_dim"]
    w1f, b1f, w2p, b2p = prep["w1f"], prep["b1f"], prep["w2p"], prep["b2p"]

    # --- Generation-aware per-core VMEM budget (headroom for compiler scratch) ---
    vmem_cap = _vmem_capacity_bytes()
    vmem_budget = max(vmem_cap - min(16 << 20, vmem_cap // 5), 16 << 20)

    # --- Batch tile: padding waste < one tile; multiple of 16 (bf16 sublanes) ---
    n_b_target = max(1, _cdiv(B, 512))
    tile_b = _round_up(_cdiv(B, n_b_target), 16)
    # Keep the double-buffered fp32 x tile under ~25% of the VMEM budget.
    while tile_b > 16 and 2 * tile_b * in_dim * 4 > vmem_budget // 4:
        tile_b = _round_up(_cdiv(tile_b, 2), 16)
    # v7x megacore: prefer >= 2 grid steps so both TensorCores get work.
    if _cdiv(B, tile_b) < 2 and tile_b >= 32:
        tile_b = _round_up(_cdiv(tile_b, 2), 16)
    n_b = _cdiv(B, tile_b)

    # NOTE: default pipelining keeps 2 buffers per input even for constant-index
    # (resident) weights; the estimate below accounts for that explicitly.
    io_bytes = 2 * (tile_b * in_dim * 4 + tile_b * out_pad * 2)     # x f32 + out bf16
    resident_bytes = 2 * (in_dim * hid_pad * 2 + hid_pad * out_pad * 2
                          + (hid_pad + out_pad) * 4)

    use_resident = (not force_streamed) \
        and resident_bytes <= int(0.45 * vmem_budget) \
        and resident_bytes + io_bytes + (2 << 20) <= vmem_budget

    if use_resident:
        vmem_limit = max(min(resident_bytes + io_bytes + (4 << 20), vmem_budget),
                         16 << 20)
        out = pl.pallas_call(
            _mlp_resident_kernel,
            out_shape=jax.ShapeDtypeStruct((B, out_pad), jnp.bfloat16),
            grid=(n_b,),
            in_specs=[
                pl.BlockSpec((tile_b, in_dim), lambda i: (i, 0)),    # x tile (pipelined)
                pl.BlockSpec((in_dim, hid_pad), lambda i: (0, 0)),   # folded w1 (resident)
                pl.BlockSpec((1, hid_pad),      lambda i: (0, 0)),   # folded bias1
                pl.BlockSpec((hid_pad, out_pad), lambda i: (0, 0)),  # w2 padded
                pl.BlockSpec((1, out_pad),      lambda i: (0, 0)),   # b2 padded
            ],
            out_specs=pl.BlockSpec((tile_b, out_pad), lambda i: (i, 0)),
            compiler_params=pltpu.CompilerParams(
                dimension_semantics=("parallel",),
                vmem_limit_bytes=int(vmem_limit)),
        )(x, w1f, b1f, w2p, b2p)
    else:
        # --- Streamed-weights fallback: tile the hid axis (reduction, last in grid) ---
        if tile_h is None:
            tile_h = 128
            for cand in (512, 256, 128):
                w_bytes = 2 * (in_dim * cand * 2 + cand * out_pad * 2 + cand * 4)
                if hid_pad % cand == 0 and \
                        w_bytes + io_bytes + tile_b * out_pad * 4 + (2 << 20) <= vmem_budget:
                    tile_h = cand
                    break
        assert hid_pad % tile_h == 0
        n_h = hid_pad // tile_h
        stream_bytes = 2 * (in_dim * tile_h * 2 + tile_h * out_pad * 2
                            + tile_h * 4 + out_pad * 4)
        vmem_limit = max(min(stream_bytes + io_bytes + tile_b * out_pad * 4 + (4 << 20),
                             vmem_budget), 16 << 20)
        out = pl.pallas_call(
            _mlp_streamed_kernel,
            out_shape=jax.ShapeDtypeStruct((B, out_pad), jnp.bfloat16),
            grid=(n_b, n_h),
            in_specs=[
                pl.BlockSpec((tile_b, in_dim), lambda i, j: (i, 0)),   # x tile
                pl.BlockSpec((in_dim, tile_h), lambda i, j: (0, j)),   # w1 column tile
                pl.BlockSpec((1, tile_h),      lambda i, j: (0, j)),   # bias1 tile
                pl.BlockSpec((tile_h, out_pad), lambda i, j: (j, 0)),  # w2 row tile
                pl.BlockSpec((1, out_pad),     lambda i, j: (0, 0)),   # b2
            ],
            out_specs=pl.BlockSpec((tile_b, out_pad), lambda i, j: (i, 0)),
            scratch_shapes=[pltpu.VMEM((tile_b, out_pad), jnp.float32)],
            compiler_params=pltpu.CompilerParams(
                dimension_semantics=("parallel", "arbitrary"),
                vmem_limit_bytes=int(vmem_limit)),
        )(x, w1f, b1f, w2p, b2p)

    # Tiny wrapper-side epilogue: drop padded columns, return fp32 like the module.
    return out[:, :out_dim].astype(jnp.float32)


# ----------------------------------------------------------------------------
# Reference + demo
# ----------------------------------------------------------------------------
def init_params(key, in_dim, out_dim, scale=0.1):
    hid = in_dim // 2
    ks = jax.random.split(key, 8)
    return {
        "w1": jax.random.normal(ks[0], (in_dim, hid), jnp.float32) * scale,
        "b1": jax.random.normal(ks[1], (hid,), jnp.float32) * scale,
        "gamma": 1.0 + 0.1 * jax.random.normal(ks[2], (hid,), jnp.float32),
        "beta": 0.1 * jax.random.normal(ks[3], (hid,), jnp.float32),
        "run_mean": 0.1 * jax.random.normal(ks[4], (hid,), jnp.float32),
        "run_var": jax.random.uniform(ks[5], (hid,), jnp.float32, minval=0.5, maxval=1.5),
        "w2": jax.random.normal(ks[6], (hid, out_dim), jnp.float32) * scale,
        "b2": jax.random.normal(ks[7], (out_dim,), jnp.float32) * scale,
    }


def net_reference(x, params, eps=1e-5):
    """Pure-JAX fp32 reference (eval-mode semantics of the PyTorch module)."""
    h = x @ params["w1"] + params["b1"]
    h = (h - params["run_mean"]) / jnp.sqrt(params["run_var"] + eps) \
        * params["gamma"] + params["beta"]
    h = jnp.maximum(h, 0.0)                       # Dropout (eval) = identity
    return jax.nn.sigmoid(h @ params["w2"] + params["b2"])


if __name__ == "__main__":
    key = jax.random.PRNGKey(0)
    k1, k2, k3, k4 = jax.random.split(key, 4)

    # --- Test 1: resident-weights path (small shapes) ---
    B1, in1, out1 = 8, 32, 4
    x1 = jax.random.normal(k1, (B1, in1), jnp.float32)
    p1 = init_params(k2, in1, out1)
    prep1 = prepare_net_params(p1)               # one-time fold/cast/pad
    o1 = jax.block_until_ready(net_forward(x1, prep1))
    r1 = net_reference(x1, p1)
    assert o1.shape == (B1, out1)
    assert jnp.allclose(o1, r1, atol=2e-2, rtol=2e-2), "resident path mismatch"

    # --- Test 2: streamed-weights fallback (forced; exercises hid accumulation
    #     across 2 tiles and a partial last batch tile) ---
    B2, in2, out2 = 24, 512, 4
    x2 = jax.random.normal(k3, (B2, in2), jnp.float32)
    p2 = init_params(k4, in2, out2, scale=0.05)
    prep2 = prepare_net_params(p2)
    o2 = jax.block_until_ready(net_forward(x2, prep2, force_streamed=True, tile_h=128))
    r2 = net_reference(x2, p2)
    assert o2.shape == (B2, out2)
    assert jnp.allclose(o2, r2, atol=2e-2, rtol=2e-2), "streamed path mismatch"

    print("KERNEL_OK")
</pallas_src>

<mosaic_0001>
module attributes {stable_mosaic.version = 11 : i64} {
  func.func @_mlp_resident_kernel(%arg0: i32, %arg1: memref<16x32xf32, #tpu.memory_space<vmem>>, %arg2: memref<32x128xbf16, #tpu.memory_space<vmem>>, %arg3: memref<1x128xf32, #tpu.memory_space<vmem>>, %arg4: memref<128x128xbf16, #tpu.memory_space<vmem>>, %arg5: memref<1x128xf32, #tpu.memory_space<vmem>>, %arg6: memref<16x128xbf16, #tpu.memory_space<vmem>>) attributes {dimension_semantics = [#tpu.dimension_semantics<parallel>], iteration_bounds = array<i64: 1>, scalar_prefetch = 0 : i64, scratch_operands = 0 : i64, tpu.core_type = #tpu.core_type<tc>, window_params = [{transform_indices = @transform_0, window_bounds = array<i64: 16, 32>}, {pipeline_mode = #tpu.pipeline_mode<synchronous>, transform_indices = @transform_1, window_bounds = array<i64: 32, 128>}, {pipeline_mode = #tpu.pipeline_mode<synchronous>, transform_indices = @transform_2, window_bounds = array<i64: 1, 128>}, {pipeline_mode = #tpu.pipeline_mode<synchronous>, transform_indices = @transform_3, window_bounds = array<i64: 128, 128>}, {pipeline_mode = #tpu.pipeline_mode<synchronous>, transform_indices = @transform_4, window_bounds = array<i64: 1, 128>}, {transform_indices = @transform_5, window_bounds = array<i64: 16, 128>}]} {
    %c0 = arith.constant 0 : index
    %c0_0 = arith.constant 0 : index
    %0 = vector.load %arg1[%c0, %c0_0] : memref<16x32xf32, #tpu.memory_space<vmem>>, vector<16x32xf32>
    %1 = arith.truncf %0 : vector<16x32xf32> to vector<16x32xbf16>
    %c0_1 = arith.constant 0 : index
    %c0_2 = arith.constant 0 : index
    %2 = vector.load %arg2[%c0_1, %c0_2] : memref<32x128xbf16, #tpu.memory_space<vmem>>, vector<32x128xbf16>
    %cst = arith.constant dense<0.000000e+00> : vector<16x128xf32>
    %3 = tpu.matmul %1, %2, %cst {dimension_numbers = #tpu.dot_dimension_numbers<[1], [0], [0], [1], [0, 0, 1, 1], [], []>} : vector<16x32xbf16>, vector<32x128xbf16>, vector<16x128xf32> -> vector<16x128xf32>
    %c0_3 = arith.constant 0 : index
    %c0_4 = arith.constant 0 : index
    %4 = vector.load %arg3[%c0_3, %c0_4] : memref<1x128xf32, #tpu.memory_space<vmem>>, vector<1x128xf32>
    %5 = vector.broadcast %4 : vector<1x128xf32> to vector<16x128xf32>
    %6 = arith.addf %3, %5 : vector<16x128xf32>
    %cst_5 = arith.constant 0.000000e+00 : f32
    %7 = vector.broadcast %cst_5 : f32 to vector<16x128xf32>
    %8 = arith.maximumf %6, %7 : vector<16x128xf32>
    %9 = arith.truncf %8 : vector<16x128xf32> to vector<16x128xbf16>
    %c0_6 = arith.constant 0 : index
    %c0_7 = arith.constant 0 : index
    %10 = vector.load %arg4[%c0_6, %c0_7] : memref<128x128xbf16, #tpu.memory_space<vmem>>, vector<128x128xbf16>
    %cst_8 = arith.constant dense<0.000000e+00> : vector<16x128xf32>
    %11 = tpu.matmul %9, %10, %cst_8 {dimension_numbers = #tpu.dot_dimension_numbers<[1], [0], [0], [1], [0, 0, 1, 1], [], []>} : vector<16x128xbf16>, vector<128x128xbf16>, vector<16x128xf32> -> vector<16x128xf32>
    %c0_9 = arith.constant 0 : index
    %c0_10 = arith.constant 0 : index
    %12 = vector.load %arg5[%c0_9, %c0_10] : memref<1x128xf32, #tpu.memory_space<vmem>>, vector<1x128xf32>
    %13 = vector.broadcast %12 : vector<1x128xf32> to vector<16x128xf32>
    %14 = arith.addf %11, %13 : vector<16x128xf32>
    %cst_11 = arith.constant 0.000000e+00 : f32
    %15 = vector.broadcast %cst_11 : f32 to vector<16x128xf32>
    %16 = arith.subf %15, %14 : vector<16x128xf32>
    %17 = math.exp %16 : vector<16x128xf32>
    %cst_12 = arith.constant 1.000000e+00 : f32
    %18 = vector.broadcast %cst_12 : f32 to vector<16x128xf32>
    %19 = arith.addf %18, %17 : vector<16x128xf32>
    %20 = tpu.reciprocal %19 {approx = true} : vector<16x128xf32> -> vector<16x128xf32>
    %21 = arith.truncf %20 : vector<16x128xf32> to vector<16x128xbf16>
    %c0_13 = arith.constant 0 : index
    %c0_14 = arith.constant 0 : index
    %22 = vector.load %arg6[%c0_13, %c0_14] : memref<16x128xbf16, #tpu.memory_space<vmem>>, vector<16x128xbf16>
    tpu.vector_store %arg6[%c0_13, %c0_14], %21 {strides = array<i32>} : memref<16x128xbf16, #tpu.memory_space<vmem>>, vector<16x128xbf16>,
    return
  }
  func.func @transform_0(%arg0: i32) -> (i32, i32) {
    %c0_i32 = arith.constant 0 : i32
    %c0_i32_0 = arith.constant 0 : i32
    return %arg0, %c0_i32 : i32, i32
  }
  func.func @transform_1(%arg0: i32) -> (i32, i32) {
    %c0_i32 = arith.constant 0 : i32
    %c0_i32_0 = arith.constant 0 : i32
    %c0_i32_1 = arith.constant 0 : i32
    return %c0_i32, %c0_i32_0 : i32, i32
  }
  func.func @transform_2(%arg0: i32) -> (i32, i32) {
    %c0_i32 = arith.constant 0 : i32
    %c0_i32_0 = arith.constant 0 : i32
    %c0_i32_1 = arith.constant 0 : i32
    return %c0_i32, %c0_i32_0 : i32, i32
  }
  func.func @transform_3(%arg0: i32) -> (i32, i32) {
    %c0_i32 = arith.constant 0 : i32
    %c0_i32_0 = arith.constant 0 : i32
    %c0_i32_1 = arith.constant 0 : i32
    return %c0_i32, %c0_i32_0 : i32, i32
  }
  func.func @transform_4(%arg0: i32) -> (i32, i32) {
    %c0_i32 = arith.constant 0 : i32
    %c0_i32_0 = arith.constant 0 : i32
    %c0_i32_1 = arith.constant 0 : i32
    return %c0_i32, %c0_i32_0 : i32, i32
  }
  func.func @transform_5(%arg0: i32) -> (i32, i32) {
    %c0_i32 = arith.constant 0 : i32
    %c0_i32_0 = arith.constant 0 : i32
    return %arg0, %c0_i32 : i32, i32
  }
}

</mosaic_0001>

<llo_original>
// kernel: tpu_custom_call.1
$region0: #{tpu_custom_call.1}
  #allocation0 [shape = 'u32[]', space=smem, size = 0x4, offset = 0x4, fixed_abs, tag = 'smem constant byte address 0x4 - core index']
  #allocation1 [shape = 'u32[144,128]{1,0:T(1,128)}', space=vmem, size = 0x12000, scoped, tag = 'internal scratch']
  %s0 = inlined_call_operand.hbm [shape: f32[8,32], index: 0, kind: input, shape index: {}]
  %s1 = inlined_call_operand.hbm [shape: bf16[32,128], index: 1, kind: input, shape index: {}]
  %s2 = inlined_call_operand.vmem [shape: f32[1,128], index: 2, kind: input, shape index: {}]
  %s3 = inlined_call_operand.hbm [shape: bf16[128,128], index: 3, kind: input, shape index: {}]
  %s4 = inlined_call_operand.vmem [shape: f32[1,128], index: 4, kind: input, shape index: {}]
  %s5 = inlined_call_operand.hbm [shape: bf16[8,128], index: 5, kind: output, shape index: {}]
  %s6 = sld [smem:[#allocation0]]
  $region42: #{tpu_custom_call.1} parent=0
    _
  %s8 = ssub.s32 1, %s6
  %s9 = scalar_select 0, %s8, %s6
  $region1: #{tpu_custom_call.1} parent=0
    #allocation2 [shape = 'u8[8192]{0}', space=vmem, size = 0x2000, scoped, tag = 'input window, operand 0, single buffered']
    #allocation3 [shape = 's32[1]{0}', space=sflag, size = 0x4, scoped, tag = 'scoped memory for tpu_custom_call.1']
    #allocation4 [shape = 's32[1]{0}', space=sflag, size = 0x4, scoped, tag = 'scoped memory for tpu_custom_call.1']
    #allocation5 [shape = 'u8[8192]{0}', space=vmem, size = 0x2000, scoped, tag = 'input window, operand 1, single buffered']
    #allocation6 [shape = 's32[1]{0}', space=sflag, size = 0x4, scoped, tag = 'scoped memory for tpu_custom_call.1']
    #allocation7 [shape = 'u8[32768]{0}', space=vmem, size = 0x8000, scoped, tag = 'input window, operand 3, single buffered']
    #allocation8 [shape = 'u8[4096]{0}', space=vmem, size = 0x1000, scoped, tag = 'output window, operand 0, single buffered']
    %10 = vsyncpa [#allocation3], 0
    %11 = vsyncpa [#allocation6], 0
    %12 = vsyncpa [#allocation4], 0
    // Predicated region
    $region2: #{tpu_custom_call.1} parent=1 // pred_check
      _
    $region3: #{tpu_custom_call.1} parent=1 // pred_check_branch
      %14 = sbr.rel (0) target = $region5
    $region4: #{tpu_custom_call.1} parent=1 // pred_region
      %s16 = ssub.s32 256, 128
      %17 = vsyncadd [#allocation3], %s16
      %s18 = sshll.u32 [#allocation2], 4
      %s19 = int_to_ptr.vmem [resolvable:$true] %s18
      %24 = dma.hbm_to_vmem [thread:$0]  %s0, 128, %s19, [#allocation3], 128, 128, 8
    $region5: #{tpu_custom_call.1} parent=1 // pred_fallthru
      _
    // Predicated region
    $region6: #{tpu_custom_call.1} parent=1 // pred_check
      _
    $region7: #{tpu_custom_call.1} parent=1 // pred_check_branch
      %26 = sbr.rel (0) target = $region9
    $region8: #{tpu_custom_call.1} parent=1 // pred_region
      %s28 = ssub.s32 256, 256
      %29 = vsyncadd [#allocation6], %s28
      %s30 = sshll.u32 [#allocation5], 4
      %s31 = int_to_ptr.vmem [resolvable:$true] %s30
      %36 = dma.hbm_to_vmem [thread:$0]  %s1, 256, %s31, [#allocation6], 64, 64, 4
    $region9: #{tpu_custom_call.1} parent=1 // pred_fallthru
      _
    // Predicated region
    $region10: #{tpu_custom_call.1} parent=1 // pred_check
      _
    $region11: #{tpu_custom_call.1} parent=1 // pred_check_branch
      %38 = sbr.rel (0) target = $region13
    $region12: #{tpu_custom_call.1} parent=1 // pred_region
      _
    $region13: #{tpu_custom_call.1} parent=1 // pred_fallthru
      _
    // Predicated region
    $region14: #{tpu_custom_call.1} parent=1 // pred_check
      _
    $region15: #{tpu_custom_call.1} parent=1 // pred_check_branch
      %40 = sbr.rel (0) target = $region17
    $region16: #{tpu_custom_call.1} parent=1 // pred_region
      %s42 = ssub.s32 1024, 1024
      %43 = vsyncadd [#allocation6], %s42
      %s44 = sshll.u32 [#allocation7], 4
      %s45 = int_to_ptr.vmem [resolvable:$true] %s44
      %50 = dma.hbm_to_vmem [thread:$0]  %s3, 1024, %s45, [#allocation6], 64, 64, 4
    $region17: #{tpu_custom_call.1} parent=1 // pred_fallthru
      _
    // Predicated region
    $region18: #{tpu_custom_call.1} parent=1 // pred_check
      _
    $region19: #{tpu_custom_call.1} parent=1 // pred_check_branch
      %52 = sbr.rel (0) target = $region21
    $region20: #{tpu_custom_call.1} parent=1 // pred_region
      _
    $region21: #{tpu_custom_call.1} parent=1 // pred_fallthru
      _
    // Predicated region
    $region22: #{tpu_custom_call.1} parent=1 // pred_check
      _
    $region23: #{tpu_custom_call.1} parent=1 // pred_check_branch
      %54 = sbr.rel (0) target = $region25
    $region24: #{tpu_custom_call.1} parent=1 // pred_region
      %55 = dma.done [#allocation3], 256
    $region25: #{tpu_custom_call.1} parent=1 // pred_fallthru
      _
    // Predicated region
    $region26: #{tpu_custom_call.1} parent=1 // pred_check
      _
    $region27: #{tpu_custom_call.1} parent=1 // pred_check_branch
      %57 = sbr.rel (0) target = $region29
    $region28: #{tpu_custom_call.1} parent=1 // pred_region
      %58 = dma.done [#allocation6], 256
    $region29: #{tpu_custom_call.1} parent=1 // pred_fallthru
      _
    // Predicated region
    $region30: #{tpu_custom_call.1} parent=1 // pred_check
      _
    $region31: #{tpu_custom_call.1} parent=1 // pred_check_branch
      %60 = sbr.rel (0) target = $region33
    $region32: #{tpu_custom_call.1} parent=1 // pred_region
      %61 = dma.done [#allocation6], 1024
    $region33: #{tpu_custom_call.1} parent=1 // pred_fallthru
      _
    %v63 = vld [vmem:[#allocation2] sm:$0xff]
    %v64 = vld [vmem:[#allocation2 + $0x8] sm:$0xff]
    %v65 = vpack.c.bf16 %v64, %v63
    %v66 = vld [vmem:[#allocation5] sm:$0xf]
    %v67 = vld [vmem:[#allocation5 + $0x4] sm:$0xf]
    %v68 = vld [vmem:[#allocation5 + $0x8] sm:$0xf]
    %v69 = vld [vmem:[#allocation5 + $0xc] sm:$0xf]
    %v70 = vld [vmem:[%s2] sm:$0x1]
    %v72 = vlaneseq
    %v73 = vshrl.u32 %v72, 7
    %v74 = vsub.s32 0, %v73
    %v75 = vrot.slane %v70, %v74
    %v81 = vunpack.c.l.b16 %v66
    %v82 = vunpack.c.l.b16 %v67
    %v83 = vunpack.c.l.b16 %v68
    %v84 = vunpack.c.l.b16 %v69
    %v85 = vpack.c.b16 %v82, %v81
    %v86 = vpack.c.b16 %v84, %v83
    %vm89 = vcmask 261120
    %v91 = vsel %vm89, %v65, 0
    %93 = vmatprep.subr.bf16.mxu0 0
    %94 = vmatpush1.bf16.msra.mxu0 %v85
    %95 = vmatprep.subr.bf16.mxu0 0
    %96 = vmatpush1.bf16.msra.mxu0 %v86
    %97 = vmatprep.subr.bf16.mxu0 0
    %98 = vmatpush1.bf16.msra.mxu0 0
    %99 = vmatprep.subr.bf16.mxu0 0
    %100 = vmatpush1.bf16.msra.mxu0 0
    %101 = vmatprep.subr.bf16.mxu0 0
    %102 = vmatpush1.bf16.msra.mxu0 0
    %103 = vmatprep.subr.bf16.mxu0 0
    %104 = vmatpush1.bf16.msra.mxu0 0
    %105 = vmatprep.subr.bf16.mxu0 0
    %106 = vmatpush1.bf16.msra.mxu0 0
    %107 = vmatprep.subr.bf16.mxu0 0
    %108 = vmatpush1.bf16.msra.mxu0 0
    %109 = vmatprep.subr.bf16.mxu0 0
    %110 = vmatpush1.bf16.msra.mxu0 0
    %111 = vmatprep.subr.bf16.mxu0 0
    %112 = vmatpush1.bf16.msra.mxu0 0
    %113 = vmatprep.subr.bf16.mxu0 0
    %114 = vmatpush1.bf16.msra.mxu0 0
    %115 = vmatprep.subr.bf16.mxu0 0
    %116 = vmatpush1.bf16.msra.mxu0 0
    %117 = vmatprep.subr.bf16.mxu0 0
    %118 = vmatpush1.bf16.msra.mxu0 0
    %119 = vmatprep.subr.bf16.mxu0 0
    %120 = vmatpush1.bf16.msra.mxu0 0
    %121 = vmatprep.subr.bf16.mxu0 0
    %122 = vmatpush1.bf16.msra.mxu0 0
    %123 = vmatprep.subr.bf16.mxu0 0
    %124 = vmatpush1.bf16.msra.mxu0 0
    %125 = vmatprep.mubr.bf16.mxu0 0
    %126 = vmatmul.mubr.bf16.gmra.mrb[0].mxu0 %v91
    %v127 = vpop.f32.mrb[0].mxu0
    %v128 = vadd.f32 %v75, %v127
    %v129 = vpop.f32.mrb[0].mxu0
    %v130 = vpop.f32.mrb[0].mxu0
    %v131 = vadd.f32 %v75, %v130
    %v132 = vpop.f32.mrb[0].mxu0
    %133 = vdwg.mxu0
    %v134 = vmax.f32 %v128, 0.0
    %v135 = vmax.f32 %v131, 0.0
    %v136 = vpack.c.bf16 %v135, %v134
    %v137 = vld [vmem:[#allocation7] sm:$0xf]
    %v138 = vld [vmem:[#allocation7 + $0x4] sm:$0xf]
    %v139 = vld [vmem:[#allocation7 + $0x8] sm:$0xf]
    %v140 = vld [vmem:[#allocation7 + $0xc] sm:$0xf]
    %v141 = vld [vmem:[#allocation7 + $0x10] sm:$0xf]
    %v142 = vld [vmem:[#allocation7 + $0x14] sm:$0xf]
    %v143 = vld [vmem:[#allocation7 + $0x18] sm:$0xf]
    %v144 = vld [vmem:[#allocation7 + $0x1c] sm:$0xf]
    %v145 = vld [vmem:[#allocation7 + $0x20] sm:$0xf]
    %v146 = vld [vmem:[#allocation7 + $0x24] sm:$0xf]
    %v147 = vld [vmem:[#allocation7 + $0x28] sm:$0xf]
    %v148 = vld [vmem:[#allocation7 + $0x2c] sm:$0xf]
    %v149 = vld [vmem:[#allocation7 + $0x30] sm:$0xf]
    %v150 = vld [vmem:[#allocation7 + $0x34] sm:$0xf]
    %v151 = vld [vmem:[#allocation7 + $0x38] sm:$0xf]
    %v152 = vld [vmem:[#allocation7 + $0x3c] sm:$0xf]
    %v153 = vld [vmem:[%s4] sm:$0x1]
    %v155 = vlaneseq
    %v156 = vshrl.u32 %v155, 7
    %v157 = vsub.s32 0, %v156
    %v158 = vrot.slane %v153, %v157
    %v176 = vunpack.c.l.b16 %v137
    %v177 = vunpack.c.l.b16 %v138
    %v178 = vunpack.c.l.b16 %v139
    %v179 = vunpack.c.l.b16 %v140
    %v180 = vunpack.c.l.b16 %v141
    %v181 = vunpack.c.l.b16 %v142
    %v182 = vunpack.c.l.b16 %v143
    %v183 = vunpack.c.l.b16 %v144
    %v184 = vunpack.c.l.b16 %v145
    %v185 = vunpack.c.l.b16 %v146
    %v186 = vunpack.c.l.b16 %v147
    %v187 = vunpack.c.l.b16 %v148
    %v188 = vunpack.c.l.b16 %v149
    %v189 = vunpack.c.l.b16 %v150
    %v190 = vunpack.c.l.b16 %v151
    %v191 = vunpack.c.l.b16 %v152
    %v192 = vpack.c.b16 %v177, %v176
    %v193 = vpack.c.b16 %v179, %v178
    %v194 = vpack.c.b16 %v181, %v180
    %v195 = vpack.c.b16 %v183, %v182
    %v196 = vpack.c.b16 %v185, %v184
    %v197 = vpack.c.b16 %v187, %v186
    %v198 = vpack.c.b16 %v189, %v188
    %v199 = vpack.c.b16 %v191, %v190
    %208 = vmatprep.subr.bf16.mxu0 0
    %209 = vmatpush1.bf16.msra.mxu0 %v192
    %210 = vmatprep.subr.bf16.mxu0 0
    %211 = vmatpush1.bf16.msra.mxu0 %v193
    %212 = vmatprep.subr.bf16.mxu0 0
    %213 = vmatpush1.bf16.msra.mxu0 %v194
    %214 = vmatprep.subr.bf16.mxu0 0
    %215 = vmatpush1.bf16.msra.mxu0 %v195
    %216 = vmatprep.subr.bf16.mxu0 0
    %217 = vmatpush1.bf16.msra.mxu0 %v196
    %218 = vmatprep.subr.bf16.mxu0 0
    %219 = vmatpush1.bf16.msra.mxu0 %v197
    %220 = vmatprep.subr.bf16.mxu0 0
    %221 = vmatpush1.bf16.msra.mxu0 %v198
    %222 = vmatprep.subr.bf16.mxu0 0
    %223 = vmatpush1.bf16.msra.mxu0 %v199
    %224 = vmatprep.subr.bf16.mxu0 0
    %225 = vmatpush1.bf16.msra.mxu0 0
    %226 = vmatprep.subr.bf16.mxu0 0
    %227 = vmatpush1.bf16.msra.mxu0 0
    %228 = vmatprep.subr.bf16.mxu0 0
    %229 = vmatpush1.bf16.msra.mxu0 0
    %230 = vmatprep.subr.bf16.mxu0 0
    %231 = vmatpush1.bf16.msra.mxu0 0
    %232 = vmatprep.subr.bf16.mxu0 0
    %233 = vmatpush1.bf16.msra.mxu0 0
    %234 = vmatprep.subr.bf16.mxu0 0
    %235 = vmatpush1.bf16.msra.mxu0 0
    %236 = vmatprep.subr.bf16.mxu0 0
    %237 = vmatpush1.bf16.msra.mxu0 0
    %238 = vmatprep.subr.bf16.mxu0 0
    %239 = vmatpush1.bf16.msra.mxu0 0
    %240 = vmatprep.mubr.bf16.mxu0 0
    %241 = vmatmul.mubr.bf16.gmra.mrb[0].mxu0 %v136
    %v242 = vpop.f32.mrb[0].mxu0
    %v243 = vadd.f32 %v158, %v242
    %v244 = vpop.f32.mrb[0].mxu0
    %v245 = vpop.f32.mrb[0].mxu0
    %v246 = vadd.f32 %v158, %v245
    %v247 = vpop.f32.mrb[0].mxu0
    %248 = vdwg.mxu0
    %v249 = vsub.f32 0.0, %v243
    %v250 = vsub.f32 0.0, %v246
    %v251 = vmul.f32 %v249, 1.442695
    %v252 = vpow.pop %v251
    %v253 = vmul.f32 %v250, 1.442695
    %v254 = vpow.pop %v253
    %v255 = vadd.f32 %v252, 1.0
    %v256 = vadd.f32 %v254, 1.0
    %v257 = vrcp.pop %v255
    %v258 = vrcp.pop %v256
    %v259 = vpack.c.bf16 %v258, %v257
    %v261 = vunpack.c.l.b16 %v259
    %v262 = vunpack.c.h.b16 %v259
    %v263 = vpack.c.b16 %v261, %v261
    %v264 = vpack.c.b16 %v262, %v262
    %267 = vst [vmem:[#allocation8] sm:$0xf] %v263
    %268 = vst [vmem:[#allocation8 + $0x4] sm:$0xf] %v264
    // Predicated region
    $region34: #{tpu_custom_call.1} parent=1 // pred_check
      _
    $region35: #{tpu_custom_call.1} parent=1 // pred_check_branch
      %270 = sbr.rel (0) target = $region37
    $region36: #{tpu_custom_call.1} parent=1 // pred_region
      %s272 = ssub.s32 128, 64
      %273 = vsyncadd [#allocation4], %s272
      %s274 = sshll.u32 [#allocation8], 4
      %s275 = int_to_ptr.vmem [resolvable:$true] %s274
      %280 = dma.vmem_to_hbm [thread:$0]  %s275, 64, %s5, [#allocation4], 64, 64, 4
    $region37: #{tpu_custom_call.1} parent=1 // pred_fallthru
      _
    // Predicated region
    $region38: #{tpu_custom_call.1} parent=1 // pred_check
      _
    $region39: #{tpu_custom_call.1} parent=1 // pred_check_branch
      %282 = sbr.rel (0) target = $region41
    $region40: #{tpu_custom_call.1} parent=1 // pred_region
      %283 = dma.done [#allocation4], 128
    $region41: #{tpu_custom_call.1} parent=1 // pred_fallthru
      _
    %284 = vsyncpa [#allocation3], 1
    %285 = vsyncpa [#allocation6], 1
    %286 = vsyncpa [#allocation4], 1

</llo_original>
